<compile_context>
chip_gen: v7x
topology: tpu7x:2x2x1
jax: 0.10.0
libtpu: 0.0.40
codegen_flags: <defaults>
</compile_context>

<pallas_src>
import numpy as np
import jax
import jax.numpy as jnp
from jax import lax
from jax.experimental import pallas as pl
from jax.experimental.pallas import tpu as pltpu

HIGHEST = jax.lax.Precision.HIGHEST  # only used in the pure-JAX reference


# --------------------------------------------------------------------------
# Fused per-batch kernel:
#   v       = Wv x + bv                                 (C, N)
#   energy  = x^T (Wq^T Wk) x + (x^T Wk^T bq)^T         (N, N)   [softmax-invariant terms dropped]
#   attn    = softmax(energy, axis=-1)
#   small   = v @ attn^T                                (C, N)
#   out     = relu( small @ Ug^T + x_ori )              (C, H*W), Ug = gamma*kron(Uh,Uw)
# --------------------------------------------------------------------------
def fused_attn_kernel(xp_ref, xo_ref, mqk_ref, wcb_ref, wv_ref, bv_ref, ug_ref,
                      o_ref):
    xp32 = xp_ref[0]                                   # (C, N) f32 pooled features
    xp = xp32.astype(jnp.bfloat16)                     # bf16 MXU operand

    # value projection: bf16-in / f32-acc MXU matmul, bias added in f32
    v = jnp.dot(wv_ref[...], xp,
                preferred_element_type=jnp.float32) + bv_ref[...]       # (C, N)

    # energy = x^T M x  (+ per-key column bias); row-constant terms cancel in softmax
    xT = xp32.T.astype(jnp.bfloat16)                   # (N, C) one small XLU transpose
    q_eff = jnp.dot(xT, mqk_ref[...],
                    preferred_element_type=jnp.float32)                 # (N, C)
    energy = jnp.dot(q_eff.astype(jnp.bfloat16), xp,
                     preferred_element_type=jnp.float32)                # (N, N)
    col_bias = jnp.sum(xp32 * wcb_ref[...], axis=0, keepdims=True)      # (1, N)
    energy = energy + col_bias

    # softmax over keys (last axis); divide goes to the EUP via pl.reciprocal
    energy = energy - jnp.max(energy, axis=-1, keepdims=True)
    p = jnp.exp(energy)
    attn = p * pl.reciprocal(jnp.sum(p, axis=-1, keepdims=True), approx=True)

    # small[c, n] = sum_m v[c, m] * attn[n, m]   (RHS-transposed contraction,
    # no transpose of attn is materialized)
    small = lax.dot_general(v.astype(jnp.bfloat16), attn.astype(jnp.bfloat16),
                            dimension_numbers=(((1,), (1,)), ((), ())),
                            preferred_element_type=jnp.float32)          # (C, N)

    # bilinear upsample as one lane-dense matmul; gamma already folded into Ug
    up = lax.dot_general(small.astype(jnp.bfloat16), ug_ref[...],
                         dimension_numbers=(((1,), (1,)), ((), ())),
                         preferred_element_type=jnp.float32)             # (C, H*W)

    o_ref[0] = jnp.maximum(up + xo_ref[0], 0.0)        # residual + ReLU, f32 store


# --------------------------------------------------------------------------
# Helpers (host-side glue)
# --------------------------------------------------------------------------
def bilinear_matrix(out_size, in_size):
    """Interpolation matrix U (out,in) for bilinear upsample, align_corners=True."""
    U = np.zeros((out_size, in_size), dtype=np.float32)
    if out_size == 1 or in_size == 1:
        U[:, 0] = 1.0
        return U
    scale = (in_size - 1) / (out_size - 1)
    src = np.arange(out_size) * scale
    i0 = np.clip(np.floor(src).astype(np.int64), 0, in_size - 1)
    i1 = np.minimum(i0 + 1, in_size - 1)
    w1 = (src - i0).astype(np.float32)
    w0 = 1.0 - w1
    np.add.at(U, (np.arange(out_size), i0), w0)
    np.add.at(U, (np.arange(out_size), i1), w1)
    return U


def self_attention_forward(x_ori, params, factor):
    B, C, H, W = x_ori.shape
    f = factor
    Hd, Wd = H // f, W // f
    N = Hd * Wd
    HW = H * W

    gamma = jnp.asarray(params["gamma"], jnp.float32)
    wq, bq = params["wq"], params["bq"]          # (C, Cq), (1, Cq)
    wk = params["wk"]                            # (C, Cq)   (bk only shifts rows -> softmax-invariant)
    wv, bv = params["wv"], params["bv"]          # (C, C),  (1, C)

    # Host-side weight prep (fold q/k 1x1 convs into one CxC bilinear form).
    mqk = (wq @ wk.T).astype(jnp.bfloat16)                       # (C, C)  Wq Wk^T in (Cin,Cout) storage
    wcb = (wk @ bq.reshape(-1, 1)).astype(jnp.float32)           # (C, 1)  per-key column-bias weights
    wv_k = wv.T.astype(jnp.bfloat16)                             # (C_out, C_in)
    bv_k = bv.reshape(C, 1).astype(jnp.float32)                  # (C, 1)

    # gamma folded into the kron-flattened bilinear-upsample matrix (H*W, Hd*Wd).
    # TODO(synk): for large H*W the dense kron matrix should be replaced by the
    # separable (Uh, Uw) two-matmul form or tiled.
    Uh = bilinear_matrix(H, Hd)
    Uw = bilinear_matrix(W, Wd)
    ug = (gamma * jnp.asarray(np.kron(Uh, Uw), jnp.float32)).astype(jnp.bfloat16)

    # TODO(synk): MaxPool2d stays as one XLA reshape+max (folding it in-kernel
    # needs strided ref loads); layouts below are pure reshapes, no transposes.
    x_pool = x_ori.reshape(B, C, Hd, f, Wd, f).max(axis=(3, 5))  # (B, C, Hd, Wd)
    xp = x_pool.reshape(B, C, N)                                 # (B, C, N)
    xo = x_ori.reshape(B, C, HW)                                 # (B, C, H*W)

    # TODO(synk): for large N (>~2k) the (N,N) energy should be tiled flash-style
    # (grid over q/k blocks with online softmax); at these sizes one block/batch is fine.
    out_flat = pl.pallas_call(
        fused_attn_kernel,
        out_shape=jax.ShapeDtypeStruct((B, C, HW), jnp.float32),
        grid=(B,),
        in_specs=[
            pl.BlockSpec((1, C, N), lambda b: (b, 0, 0)),    # pooled features
            pl.BlockSpec((1, C, HW), lambda b: (b, 0, 0)),   # residual input
            pl.BlockSpec((C, C), lambda b: (0, 0)),          # M = Wq Wk^T
            pl.BlockSpec((C, 1), lambda b: (0, 0)),          # column-bias weights
            pl.BlockSpec((C, C), lambda b: (0, 0)),          # value weights
            pl.BlockSpec((C, 1), lambda b: (0, 0)),          # value bias
            pl.BlockSpec((HW, N), lambda b: (0, 0)),         # gamma * kron(Uh, Uw)
        ],
        out_specs=pl.BlockSpec((1, C, HW), lambda b: (b, 0, 0)),
        compiler_params=pltpu.CompilerParams(
            dimension_semantics=("parallel",),               # B>=2 -> both v7x TCs busy
            vmem_limit_bytes=32 * 1024 * 1024,
        ),
    )(xp, xo, mqk, wcb, wv_k, bv_k, ug)

    return out_flat.reshape(B, C, H, W)


# --------------------------------------------------------------------------
# Pure-JAX fp32 reference (mirrors the PyTorch forward semantics exactly,
# including the explicit q/k/v biases and no algebraic folding).
# --------------------------------------------------------------------------
def ref_forward(x_ori, params, factor):
    gamma, wq, bq, wk, bk, wv, bv = (
        params["gamma"], params["wq"], params["bq"], params["wk"],
        params["bk"], params["wv"], params["bv"])
    B, C, H, W = x_ori.shape
    f = factor
    Hd, Wd = H // f, W // f
    N = Hd * Wd
    x = x_ori.reshape(B, C, Hd, f, Wd, f).max(axis=(3, 5))
    xnc = x.reshape(B, C, N).transpose(0, 2, 1)                     # (B, N, C)
    q = jnp.einsum('bnc,cq->bnq', xnc, wq, precision=HIGHEST) + bq
    k = jnp.einsum('bnc,cq->bnq', xnc, wk, precision=HIGHEST) + bk
    v = jnp.einsum('bnc,cd->bnd', xnc, wv, precision=HIGHEST) + bv
    energy = jnp.einsum('bnq,bmq->bnm', q, k, precision=HIGHEST)
    attn = jax.nn.softmax(energy, axis=-1)
    out_nc = jnp.einsum('bnm,bmc->bnc', attn, v, precision=HIGHEST)
    out_small = out_nc.transpose(0, 2, 1).reshape(B, C, Hd, Wd)
    Uh = jnp.asarray(bilinear_matrix(H, Hd))
    Uw = jnp.asarray(bilinear_matrix(W, Wd))
    up = jnp.einsum('hm,bcmn,wn->bchw', Uh, out_small, Uw, precision=HIGHEST)
    return jnp.maximum(gamma * up + x_ori, 0.0)


if __name__ == "__main__":
    B, C, H, W = 2, 16, 16, 16
    factor = 2
    Cq = max(C // 8, 1)

    key = jax.random.PRNGKey(0)
    k_x, k_wq, k_bq, k_wk, k_bk, k_wv, k_bv = jax.random.split(key, 7)

    x_ori = jax.random.normal(k_x, (B, C, H, W), jnp.float32)
    params = {
        "gamma": jnp.float32(0.5),   # PyTorch init is 0.0; nonzero to exercise the attention path
        "wq": jax.random.normal(k_wq, (C, Cq), jnp.float32) * 0.1,
        "bq": jax.random.normal(k_bq, (1, Cq), jnp.float32) * 0.1,
        "wk": jax.random.normal(k_wk, (C, Cq), jnp.float32) * 0.1,
        "bk": jax.random.normal(k_bk, (1, Cq), jnp.float32) * 0.1,
        "wv": jax.random.normal(k_wv, (C, C), jnp.float32) * 0.1,
        "bv": jax.random.normal(k_bv, (1, C), jnp.float32) * 0.1,
    }

    out = self_attention_forward(x_ori, params, factor)
    out = jax.block_until_ready(out)

    ref = ref_forward(x_ori, params, factor)
    ref = jax.block_until_ready(ref)

    # bf16-in / f32-acc MXU matmuls compared against an fp32 HIGHEST reference
    # -> tolerance loosened accordingly.
    if not bool(jnp.allclose(out, ref, atol=2e-2, rtol=2e-2)):
        max_err = float(jnp.max(jnp.abs(out - ref)))
        raise AssertionError(
            f"Pallas output does not match JAX reference (max|err|={max_err:.3e})")

    print("KERNEL_OK")
</pallas_src>

<mosaic_0001>
module attributes {stable_mosaic.version = 11 : i64} {
  func.func @fused_attn_kernel(%arg0: i32, %arg1: memref<1x16x64xf32, #tpu.memory_space<vmem>>, %arg2: memref<1x16x256xf32, #tpu.memory_space<vmem>>, %arg3: memref<16x16xbf16, #tpu.memory_space<vmem>>, %arg4: memref<16x1xf32, #tpu.memory_space<vmem>>, %arg5: memref<16x16xbf16, #tpu.memory_space<vmem>>, %arg6: memref<16x1xf32, #tpu.memory_space<vmem>>, %arg7: memref<256x64xbf16, #tpu.memory_space<vmem>>, %arg8: memref<1x16x256xf32, #tpu.memory_space<vmem>>) attributes {dimension_semantics = [#tpu.dimension_semantics<parallel>], iteration_bounds = array<i64: 2>, scalar_prefetch = 0 : i64, scratch_operands = 0 : i64, tpu.core_type = #tpu.core_type<tc>, window_params = [{transform_indices = @transform_0, window_bounds = array<i64: 1, 16, 64>}, {transform_indices = @transform_1, window_bounds = array<i64: 1, 16, 256>}, {pipeline_mode = #tpu.pipeline_mode<synchronous>, transform_indices = @transform_2, window_bounds = array<i64: 16, 16>}, {pipeline_mode = #tpu.pipeline_mode<synchronous>, transform_indices = @transform_3, window_bounds = array<i64: 16, 1>}, {pipeline_mode = #tpu.pipeline_mode<synchronous>, transform_indices = @transform_4, window_bounds = array<i64: 16, 16>}, {pipeline_mode = #tpu.pipeline_mode<synchronous>, transform_indices = @transform_5, window_bounds = array<i64: 16, 1>}, {pipeline_mode = #tpu.pipeline_mode<synchronous>, transform_indices = @transform_6, window_bounds = array<i64: 256, 64>}, {transform_indices = @transform_7, window_bounds = array<i64: 1, 16, 256>}]} {
    %c0 = arith.constant 0 : index
    %c0_0 = arith.constant 0 : index
    %c0_1 = arith.constant 0 : index
    %0 = vector.load %arg1[%c0, %c0_0, %c0_1] : memref<1x16x64xf32, #tpu.memory_space<vmem>>, vector<1x16x64xf32>
    %1 = vector.shape_cast %0 : vector<1x16x64xf32> to vector<16x64xf32>
    %2 = arith.truncf %1 : vector<16x64xf32> to vector<16x64xbf16>
    %c0_2 = arith.constant 0 : index
    %c0_3 = arith.constant 0 : index
    %3 = vector.load %arg5[%c0_2, %c0_3] : memref<16x16xbf16, #tpu.memory_space<vmem>>, vector<16x16xbf16>
    %cst = arith.constant dense<0.000000e+00> : vector<16x64xf32>
    %4 = tpu.matmul %3, %2, %cst {dimension_numbers = #tpu.dot_dimension_numbers<[1], [0], [0], [1], [0, 0, 1, 1], [], []>} : vector<16x16xbf16>, vector<16x64xbf16>, vector<16x64xf32> -> vector<16x64xf32>
    %c0_4 = arith.constant 0 : index
    %c0_5 = arith.constant 0 : index
    %5 = vector.load %arg6[%c0_4, %c0_5] : memref<16x1xf32, #tpu.memory_space<vmem>>, vector<16x1xf32>
    %6 = vector.broadcast %5 : vector<16x1xf32> to vector<16x64xf32>
    %7 = arith.addf %4, %6 : vector<16x64xf32>
    %8 = tpu.transpose %1, [1, 0] : vector<16x64xf32> -> vector<64x16xf32>
    %9 = arith.truncf %8 : vector<64x16xf32> to vector<64x16xbf16>
    %c0_6 = arith.constant 0 : index
    %c0_7 = arith.constant 0 : index
    %10 = vector.load %arg3[%c0_6, %c0_7] : memref<16x16xbf16, #tpu.memory_space<vmem>>, vector<16x16xbf16>
    %cst_8 = arith.constant dense<0.000000e+00> : vector<64x16xf32>
    %11 = tpu.matmul %9, %10, %cst_8 {dimension_numbers = #tpu.dot_dimension_numbers<[1], [0], [0], [1], [0, 0, 1, 1], [], []>} : vector<64x16xbf16>, vector<16x16xbf16>, vector<64x16xf32> -> vector<64x16xf32>
    %12 = arith.truncf %11 : vector<64x16xf32> to vector<64x16xbf16>
    %cst_9 = arith.constant dense<0.000000e+00> : vector<64x64xf32>
    %13 = tpu.matmul %12, %2, %cst_9 {dimension_numbers = #tpu.dot_dimension_numbers<[1], [0], [0], [1], [0, 0, 1, 1], [], []>} : vector<64x16xbf16>, vector<16x64xbf16>, vector<64x64xf32> -> vector<64x64xf32>
    %c0_10 = arith.constant 0 : index
    %c0_11 = arith.constant 0 : index
    %14 = vector.load %arg4[%c0_10, %c0_11] : memref<16x1xf32, #tpu.memory_space<vmem>>, vector<16x1xf32>
    %15 = vector.broadcast %14 : vector<16x1xf32> to vector<16x64xf32>
    %16 = arith.mulf %1, %15 : vector<16x64xf32>
    %cst_12 = arith.constant dense<0.000000e+00> : vector<64xf32>
    %17 = vector.multi_reduction <add>, %16, %cst_12 [0] : vector<16x64xf32> to vector<64xf32>
    %18 = vector.shape_cast %17 : vector<64xf32> to vector<1x64xf32>
    %19 = vector.broadcast %18 : vector<1x64xf32> to vector<64x64xf32>
    %20 = arith.addf %13, %19 : vector<64x64xf32>
    %cst_13 = arith.constant dense<0xFF800000> : vector<64xf32>
    %21 = vector.multi_reduction <maximumf>, %20, %cst_13 [1] : vector<64x64xf32> to vector<64xf32>
    %22 = vector.shape_cast %21 : vector<64xf32> to vector<64x1xf32>
    %23 = vector.broadcast %22 : vector<64x1xf32> to vector<64x64xf32>
    %24 = arith.subf %20, %23 : vector<64x64xf32>
    %25 = math.exp %24 : vector<64x64xf32>
    %cst_14 = arith.constant dense<0.000000e+00> : vector<64xf32>
    %26 = vector.multi_reduction <add>, %25, %cst_14 [1] : vector<64x64xf32> to vector<64xf32>
    %27 = vector.shape_cast %26 : vector<64xf32> to vector<64x1xf32>
    %28 = tpu.reciprocal %27 {approx = true} : vector<64x1xf32> -> vector<64x1xf32>
    %29 = vector.broadcast %28 : vector<64x1xf32> to vector<64x64xf32>
    %30 = arith.mulf %25, %29 : vector<64x64xf32>
    %31 = arith.truncf %7 : vector<16x64xf32> to vector<16x64xbf16>
    %32 = arith.truncf %30 : vector<64x64xf32> to vector<64x64xbf16>
    %cst_15 = arith.constant dense<0.000000e+00> : vector<16x64xf32>
    %33 = tpu.matmul %31, %32, %cst_15 {dimension_numbers = #tpu.dot_dimension_numbers<[1], [1], [0], [0], [0, 0, 1, 0], [], []>} : vector<16x64xbf16>, vector<64x64xbf16>, vector<16x64xf32> -> vector<16x64xf32>
    %34 = arith.truncf %33 : vector<16x64xf32> to vector<16x64xbf16>
    %c0_16 = arith.constant 0 : index
    %c0_17 = arith.constant 0 : index
    %35 = vector.load %arg7[%c0_16, %c0_17] : memref<256x64xbf16, #tpu.memory_space<vmem>>, vector<256x64xbf16>
    %cst_18 = arith.constant dense<0.000000e+00> : vector<16x256xf32>
    %36 = tpu.matmul %34, %35, %cst_18 {dimension_numbers = #tpu.dot_dimension_numbers<[1], [1], [0], [0], [0, 0, 1, 0], [], []>} : vector<16x64xbf16>, vector<256x64xbf16>, vector<16x256xf32> -> vector<16x256xf32>
    %c0_19 = arith.constant 0 : index
    %c0_20 = arith.constant 0 : index
    %c0_21 = arith.constant 0 : index
    %37 = vector.load %arg2[%c0_19, %c0_20, %c0_21] : memref<1x16x256xf32, #tpu.memory_space<vmem>>, vector<1x16x256xf32>
    %38 = vector.shape_cast %37 : vector<1x16x256xf32> to vector<16x256xf32>
    %39 = arith.addf %36, %38 : vector<16x256xf32>
    %cst_22 = arith.constant 0.000000e+00 : f32
    %40 = vector.broadcast %cst_22 : f32 to vector<16x256xf32>
    %41 = arith.maximumf %39, %40 : vector<16x256xf32>
    %c0_23 = arith.constant 0 : index
    %c0_24 = arith.constant 0 : index
    %c0_25 = arith.constant 0 : index
    %42 = vector.load %arg8[%c0_23, %c0_24, %c0_25] : memref<1x16x256xf32, #tpu.memory_space<vmem>>, vector<1x16x256xf32>
    %43 = vector.shape_cast %42 : vector<1x16x256xf32> to vector<16x256xf32>
    %44 = vector.shape_cast %41 : vector<16x256xf32> to vector<1x16x256xf32>
    tpu.vector_store %arg8[%c0_23, %c0_24, %c0_25], %44 {strides = array<i32>} : memref<1x16x256xf32, #tpu.memory_space<vmem>>, vector<1x16x256xf32>,
    return
  }
  func.func @transform_0(%arg0: i32) -> (i32, i32, i32) {
    %c0_i32 = arith.constant 0 : i32
    %c0_i32_0 = arith.constant 0 : i32
    %c0_i32_1 = arith.constant 0 : i32
    return %arg0, %c0_i32, %c0_i32_0 : i32, i32, i32
  }
  func.func @transform_1(%arg0: i32) -> (i32, i32, i32) {
    %c0_i32 = arith.constant 0 : i32
    %c0_i32_0 = arith.constant 0 : i32
    %c0_i32_1 = arith.constant 0 : i32
    return %arg0, %c0_i32, %c0_i32_0 : i32, i32, i32
  }
  func.func @transform_2(%arg0: i32) -> (i32, i32) {
    %c0_i32 = arith.constant 0 : i32
    %c0_i32_0 = arith.constant 0 : i32
    %c0_i32_1 = arith.constant 0 : i32
    return %c0_i32, %c0_i32_0 : i32, i32
  }
  func.func @transform_3(%arg0: i32) -> (i32, i32) {
    %c0_i32 = arith.constant 0 : i32
    %c0_i32_0 = arith.constant 0 : i32
    %c0_i32_1 = arith.constant 0 : i32
    return %c0_i32, %c0_i32_0 : i32, i32
  }
  func.func @transform_4(%arg0: i32) -> (i32, i32) {
    %c0_i32 = arith.constant 0 : i32
    %c0_i32_0 = arith.constant 0 : i32
    %c0_i32_1 = arith.constant 0 : i32
    return %c0_i32, %c0_i32_0 : i32, i32
  }
  func.func @transform_5(%arg0: i32) -> (i32, i32) {
    %c0_i32 = arith.constant 0 : i32
    %c0_i32_0 = arith.constant 0 : i32
    %c0_i32_1 = arith.constant 0 : i32
    return %c0_i32, %c0_i32_0 : i32, i32
  }
  func.func @transform_6(%arg0: i32) -> (i32, i32) {
    %c0_i32 = arith.constant 0 : i32
    %c0_i32_0 = arith.constant 0 : i32
    %c0_i32_1 = arith.constant 0 : i32
    return %c0_i32, %c0_i32_0 : i32, i32
  }
  func.func @transform_7(%arg0: i32) -> (i32, i32, i32) {
    %c0_i32 = arith.constant 0 : i32
    %c0_i32_0 = arith.constant 0 : i32
    %c0_i32_1 = arith.constant 0 : i32
    return %arg0, %c0_i32, %c0_i32_0 : i32, i32, i32
  }
}

</mosaic_0001>

<llo_original>
// kernel: tpu_custom_call.1
$region0: #{tpu_custom_call.1}
  #allocation0 [shape = 'u32[]', space=smem, size = 0x4, offset = 0x4, fixed_abs, tag = 'smem constant byte address 0x4 - core index']
  #allocation1 [shape = 'u32[144,128]{1,0:T(1,128)}', space=vmem, size = 0x12000, scoped, tag = 'internal scratch']
  %s0 = inlined_call_operand.vmem [shape: f32[2,16,64], index: 0, kind: input, shape index: {}]
  %s1 = inlined_call_operand.vmem [shape: f32[2,16,256], index: 1, kind: input, shape index: {}]
  %s2 = inlined_call_operand.vmem [shape: bf16[16,16], index: 2, kind: input, shape index: {}]
  %s3 = inlined_call_operand.vmem [shape: f32[16,1], index: 3, kind: input, shape index: {}]
  %s4 = inlined_call_operand.vmem [shape: bf16[16,16], index: 4, kind: input, shape index: {}]
  %s5 = inlined_call_operand.vmem [shape: f32[16,1], index: 5, kind: input, shape index: {}]
  %s6 = inlined_call_operand.vmem [shape: bf16[256,64], index: 6, kind: input, shape index: {}]
  %s7 = inlined_call_operand.hbm [shape: f32[2,16,256], index: 7, kind: output, shape index: {}]
  %s8 = sld [smem:[#allocation0]]
  $region61: #{tpu_custom_call.1} parent=0
    _
  %s10 = ssub.s32 1, %s8
  %s11 = scalar_select 0, %s10, %s8
  $region1: #{tpu_custom_call.1} parent=0
    #allocation2 [shape = 'u8[32768]{0}', space=vmem, size = 0x8000, scoped, tag = 'output window, operand 0']
    #allocation3 [shape = 's32[2]{0}', space=sflag, size = 0x8, scoped, tag = 'scoped memory for tpu_custom_call.1']
    %12 = vsyncpa [#allocation3], 0
    %s13 = scalar_lea.sflag [#allocation3], 1
    %14 = vsyncpa %s13, 0
    loop: start=0, step=1, limit=4
    $region2: #{tpu_custom_call.1} parent=1 // loop_pre_header
      _
    $region3: #{tpu_custom_call.1} parent=1 // loop_header
      %s16 = sphi 0, %s20
      %p17 = scmp.ge.s32.totalorder %s16, 4
      %s26 = sphi 0, %s28
      %s29 = sphi 0, %s26
      %s30 = sphi 0, %s29
      %s46 = sphi 0, %s30
      %s52 = sphi 0, %s54
      %s55 = sphi 0, %s52
      %s56 = sphi 0, %s55
      %s72 = sphi 0, %s56
      %s76 = sphi 0, %s76
      %s78 = sphi 0, %s76
      %s79 = sphi 0, %s78
      %s93 = sphi 0, %s79
      %s97 = sphi 0, %s97
      %s99 = sphi 0, %s97
      %s100 = sphi 0, %s99
      %s114 = sphi 0, %s100
      %s118 = sphi 0, %s118
      %s120 = sphi 0, %s118
      %s121 = sphi 0, %s120
      %s135 = sphi 0, %s121
      %s139 = sphi 0, %s139
      %s141 = sphi 0, %s139
      %s142 = sphi 0, %s141
      %s156 = sphi 0, %s142
      %s160 = sphi 0, %s160
      %s162 = sphi 0, %s160
      %s163 = sphi 0, %s162
      %s177 = sphi 0, %s163
      %s183 = sphi 0, %s185
      %s186 = sphi 0, %s183
      %s187 = sphi 0, %s186
      %s203 = sphi 0, %s187
    $region4: #{tpu_custom_call.1} parent=1 // loop_header_branch
      %19 = sbr.rel (%p17) target = $region8
    $region5: #{tpu_custom_call.1} parent=1 // loop_body
      %s21 = ssub.s32 %s16, 1
      %s22 = ssub.s32 %s16, 2
      %s23 = sadd.s32 %s16, 1
      %s24 = ssub.s32 %s16, %s23
      %p25 = scmp.eq.s32.totalorder %s24, 0
      %s27 = sadd.s32 %s26, 1
      %s28 = scalar_select %p25, %s26, %s27
      %p31 = pneg %p25
      %p32 = scmp.eq.s32.totalorder %s16, 1
      %p33 = por %p31, %p32
      %p34 = scmp.ne.s32.totalorder %s26, %s29
      %p35 = scmp.eq.s32.totalorder %s16, 0
      %p36 = por %p34, %p35
      %p37 = scmp.ne.s32.totalorder %s26, %s29
      %p38 = scmp.eq.s32.totalorder %s21, 1
      %p39 = por %p37, %p38
      %p40 = scmp.ne.s32.totalorder %s29, %s30
      %p41 = scmp.eq.s32.totalorder %s21, 0
      %p42 = por %p40, %p41
      %p43 = scmp.ne.s32.totalorder %s29, %s30
      %p44 = scmp.eq.s32.totalorder %s22, 1
      %p45 = por %p43, %p44
      %p47 = scmp.ne.s32.totalorder %s30, %s46
      %p48 = scmp.eq.s32.totalorder %s22, 0
      %p49 = por %p47, %p48
      %s50 = ssub.s32 %s16, %s23
      %p51 = scmp.eq.s32.totalorder %s50, 0
      %s53 = sadd.s32 %s52, 1
      %s54 = scalar_select %p51, %s52, %s53
      %p57 = pneg %p51
      %p58 = scmp.eq.s32.totalorder %s16, 1
      %p59 = por %p57, %p58
      %p60 = scmp.ne.s32.totalorder %s52, %s55
      %p61 = scmp.eq.s32.totalorder %s16, 0
      %p62 = por %p60, %p61
      %p63 = scmp.ne.s32.totalorder %s52, %s55
      %p64 = scmp.eq.s32.totalorder %s21, 1
      %p65 = por %p63, %p64
      %p66 = scmp.ne.s32.totalorder %s55, %s56
      %p67 = scmp.eq.s32.totalorder %s21, 0
      %p68 = por %p66, %p67
      %p69 = scmp.ne.s32.totalorder %s55, %s56
      %p70 = scmp.eq.s32.totalorder %s22, 1
      %p71 = por %p69, %p70
      %p73 = scmp.ne.s32.totalorder %s56, %s72
      %p74 = scmp.eq.s32.totalorder %s22, 0
      %p75 = por %p73, %p74
      %s77 = sadd.s32 %s76, 1
      %p80 = scmp.eq.s32.totalorder %s16, 1
      %p81 = scmp.ne.s32.totalorder %s76, %s78
      %p82 = scmp.eq.s32.totalorder %s16, 0
      %p83 = por %p81, %p82
      %p84 = scmp.ne.s32.totalorder %s76, %s78
      %p85 = scmp.eq.s32.totalorder %s21, 1
      %p86 = por %p84, %p85
      %p87 = scmp.ne.s32.totalorder %s78, %s79
      %p88 = scmp.eq.s32.totalorder %s21, 0
      %p89 = por %p87, %p88
      %p90 = scmp.ne.s32.totalorder %s78, %s79
      %p91 = scmp.eq.s32.totalorder %s22, 1
      %p92 = por %p90, %p91
      %p94 = scmp.ne.s32.totalorder %s79, %s93
      %p95 = scmp.eq.s32.totalorder %s22, 0
      %p96 = por %p94, %p95
      %s98 = sadd.s32 %s97, 1
      %p101 = scmp.eq.s32.totalorder %s16, 1
      %p102 = scmp.ne.s32.totalorder %s97, %s99
      %p103 = scmp.eq.s32.totalorder %s16, 0
      %p104 = por %p102, %p103
      %p105 = scmp.ne.s32.totalorder %s97, %s99
      %p106 = scmp.eq.s32.totalorder %s21, 1
      %p107 = por %p105, %p106
      %p108 = scmp.ne.s32.totalorder %s99, %s100
      %p109 = scmp.eq.s32.totalorder %s21, 0
      %p110 = por %p108, %p109
      %p111 = scmp.ne.s32.totalorder %s99, %s100
      %p112 = scmp.eq.s32.totalorder %s22, 1
      %p113 = por %p111, %p112
      %p115 = scmp.ne.s32.totalorder %s100, %s114
      %p116 = scmp.eq.s32.totalorder %s22, 0
      %p117 = por %p115, %p116
      %s119 = sadd.s32 %s118, 1
      %p122 = scmp.eq.s32.totalorder %s16, 1
      %p123 = scmp.ne.s32.totalorder %s118, %s120
      %p124 = scmp.eq.s32.totalorder %s16, 0
      %p125 = por %p123, %p124
      %p126 = scmp.ne.s32.totalorder %s118, %s120
      %p127 = scmp.eq.s32.totalorder %s21, 1
      %p128 = por %p126, %p127
      %p129 = scmp.ne.s32.totalorder %s120, %s121
      %p130 = scmp.eq.s32.totalorder %s21, 0
      %p131 = por %p129, %p130
      %p132 = scmp.ne.s32.totalorder %s120, %s121
      %p133 = scmp.eq.s32.totalorder %s22, 1
      %p134 = por %p132, %p133
      %p136 = scmp.ne.s32.totalorder %s121, %s135
      %p137 = scmp.eq.s32.totalorder %s22, 0
      %p138 = por %p136, %p137
      %s140 = sadd.s32 %s139, 1
      %p143 = scmp.eq.s32.totalorder %s16, 1
      %p144 = scmp.ne.s32.totalorder %s139, %s141
      %p145 = scmp.eq.s32.totalorder %s16, 0
      %p146 = por %p144, %p145
      %p147 = scmp.ne.s32.totalorder %s139, %s141
      %p148 = scmp.eq.s32.totalorder %s21, 1
      %p149 = por %p147, %p148
      %p150 = scmp.ne.s32.totalorder %s141, %s142
      %p151 = scmp.eq.s32.totalorder %s21, 0
      %p152 = por %p150, %p151
      %p153 = scmp.ne.s32.totalorder %s141, %s142
      %p154 = scmp.eq.s32.totalorder %s22, 1
      %p155 = por %p153, %p154
      %p157 = scmp.ne.s32.totalorder %s142, %s156
      %p158 = scmp.eq.s32.totalorder %s22, 0
      %p159 = por %p157, %p158
      %s161 = sadd.s32 %s160, 1
      %p164 = scmp.eq.s32.totalorder %s16, 1
      %p165 = scmp.ne.s32.totalorder %s160, %s162
      %p166 = scmp.eq.s32.totalorder %s16, 0
      %p167 = por %p165, %p166
      %p168 = scmp.ne.s32.totalorder %s160, %s162
      %p169 = scmp.eq.s32.totalorder %s21, 1
      %p170 = por %p168, %p169
      %p171 = scmp.ne.s32.totalorder %s162, %s163
      %p172 = scmp.eq.s32.totalorder %s21, 0
      %p173 = por %p171, %p172
      %p174 = scmp.ne.s32.totalorder %s162, %s163
      %p175 = scmp.eq.s32.totalorder %s22, 1
      %p176 = por %p174, %p175
      %p178 = scmp.ne.s32.totalorder %s163, %s177
      %p179 = scmp.eq.s32.totalorder %s22, 0
      %p180 = por %p178, %p179
      %s181 = ssub.s32 %s16, %s23
      %p182 = scmp.eq.s32.totalorder %s181, 0
      %s184 = sadd.s32 %s183, 1
      %s185 = scalar_select %p182, %s183, %s184
      %p188 = pneg %p182
      %p189 = scmp.eq.s32.totalorder %s16, 1
      %p190 = por %p188, %p189
      %p191 = scmp.ne.s32.totalorder %s183, %s186
      %p192 = scmp.eq.s32.totalorder %s16, 0
      %p193 = por %p191, %p192
      %p194 = scmp.ne.s32.totalorder %s183, %s186
      %p195 = scmp.eq.s32.totalorder %s21, 1
      %p196 = por %p194, %p195
      %p197 = scmp.ne.s32.totalorder %s186, %s187
      %p198 = scmp.eq.s32.totalorder %s21, 0
      %p199 = por %p197, %p198
      %p200 = scmp.ne.s32.totalorder %s186, %s187
      %p201 = scmp.eq.s32.totalorder %s22, 1
      %p202 = por %p200, %p201
      %p204 = scmp.ne.s32.totalorder %s187, %s203
      %p205 = scmp.eq.s32.totalorder %s22, 0
      %p206 = por %p204, %p205
      %p207 = scmp.le.s32.totalorder 1, %s16
      %p208 = scmp.lt.s32.totalorder %s16, 3
      %p209 = pnand %p207, %p208
      %p210 = pneg %p209
      // Predicated region
      $region9: #{tpu_custom_call.1} parent=5 // pred_check
        _
      $region10: #{tpu_custom_call.1} parent=5 // pred_check_branch
        %212 = sbr.rel (%p209) target = $region12
      $region11: #{tpu_custom_call.1} parent=5 // pred_region
        %s213 = ssub.s32 %s16, 1
        // Predicated region
        $region13: #{tpu_custom_call.1} parent=11 // pred_check
          %p214 = pneg %p89
        $region14: #{tpu_custom_call.1} parent=11 // pred_check_branch
          %216 = sbr.rel (%p214) target = $region16
        $region15: #{tpu_custom_call.1} parent=11 // pred_region
          _
        $region16: #{tpu_custom_call.1} parent=11 // pred_fallthru
          _
        // Predicated region
        $region17: #{tpu_custom_call.1} parent=11 // pred_check
          %p217 = pneg %p110
        $region18: #{tpu_custom_call.1} parent=11 // pred_check_branch
          %219 = sbr.rel (%p217) target = $region20
        $region19: #{tpu_custom_call.1} parent=11 // pred_region
          _
        $region20: #{tpu_custom_call.1} parent=11 // pred_fallthru
          _
        // Predicated region
        $region21: #{tpu_custom_call.1} parent=11 // pred_check
          %p220 = pneg %p131
        $region22: #{tpu_custom_call.1} parent=11 // pred_check_branch
          %222 = sbr.rel (%p220) target = $region24
        $region23: #{tpu_custom_call.1} parent=11 // pred_region
          _
        $region24: #{tpu_custom_call.1} parent=11 // pred_fallthru
          _
        // Predicated region
        $region25: #{tpu_custom_call.1} parent=11 // pred_check
          %p223 = pneg %p152
        $region26: #{tpu_custom_call.1} parent=11 // pred_check_branch
          %225 = sbr.rel (%p223) target = $region28
        $region27: #{tpu_custom_call.1} parent=11 // pred_region
          _
        $region28: #{tpu_custom_call.1} parent=11 // pred_fallthru
          _
        // Predicated region
        $region29: #{tpu_custom_call.1} parent=11 // pred_check
          %p226 = pneg %p173
        $region30: #{tpu_custom_call.1} parent=11 // pred_check_branch
          %228 = sbr.rel (%p226) target = $region32
        $region31: #{tpu_custom_call.1} parent=11 // pred_region
          _
        $region32: #{tpu_custom_call.1} parent=11 // pred_fallthru
          _
      $region12: #{tpu_custom_call.1} parent=5 // pred_fallthru
        _
      %p229 = scmp.lt.s32.totalorder %s16, 2
      // Predicated region
      $region33: #{tpu_custom_call.1} parent=5 // pred_check
        %p230 = pneg %p229
      $region34: #{tpu_custom_call.1} parent=5 // pred_check_branch
        %232 = sbr.rel (%p230) target = $region36
      $region35: #{tpu_custom_call.1} parent=5 // pred_region
        // Predicated region
        $region37: #{tpu_custom_call.1} parent=35 // pred_check
          %p233 = pneg %p36
        $region38: #{tpu_custom_call.1} parent=35 // pred_check_branch
          %235 = sbr.rel (%p233) target = $region40
        $region39: #{tpu_custom_call.1} parent=35 // pred_region
          %p236 = scmp.lt.s32.totalorder %s16, 1
          %s237 = scalar_select %p236, %s16, 1
          %s238 = smul.addr %s237, 2
          %s239 = smul.addr %s238, 8
          %s240 = scalar_lea.vmem %s0, %s239
        $region40: #{tpu_custom_call.1} parent=35 // pred_fallthru
          _
        // Predicated region
        $region41: #{tpu_custom_call.1} parent=35 // pred_check
          %p241 = pneg %p62
        $region42: #{tpu_custom_call.1} parent=35 // pred_check_branch
          %243 = sbr.rel (%p241) target = $region44
        $region43: #{tpu_custom_call.1} parent=35 // pred_region
          %p244 = scmp.lt.s32.totalorder %s16, 1
          %s245 = scalar_select %p244, %s16, 1
          %s246 = smul.addr %s245, 4
          %s247 = smul.addr %s246, 8
          %s248 = scalar_lea.vmem %s1, %s247
        $region44: #{tpu_custom_call.1} parent=35 // pred_fallthru
          _
      $region36: #{tpu_custom_call.1} parent=5 // pred_fallthru
        _
      %p249 = scmp.le.s32.totalorder 1, %s16
      %p250 = scmp.lt.s32.totalorder %s16, 3
      %p251 = pnand %p249, %p250
      %p252 = pneg %p251
      // Predicated region
      $region45: #{tpu_custom_call.1} parent=5 // pred_check
        _
      $region46: #{tpu_custom_call.1} parent=5 // pred_check_branch
        %254 = sbr.rel (%p251) target = $region48
      $region47: #{tpu_custom_call.1} parent=5 // pred_region
        %s255 = ssub.s32 %s16, 1
        %p256 = scmp.lt.s32.totalorder %s21, 1
        %s257 = scalar_select %p256, %s21, 1
        %s258 = smul.addr %s257, 2
        %s259 = smul.addr %s258, 8
        %s260 = scalar_lea.vmem %s0, %s259
        %p261 = pneg %p42
        %p262 = pneg %p39
        %p263 = scmp.lt.s32.totalorder %s21, 1
        %s264 = scalar_select %p263, %s21, 1
        %s265 = smul.addr %s264, 4
        %s266 = smul.addr %s265, 8
        %s267 = scalar_lea.vmem %s1, %s266
        %p268 = pneg %p68
        %p269 = pneg %p65
        %p270 = pneg %p89
        %p271 = pneg %p86
        %p272 = pneg %p110
        %p273 = pneg %p107
        %p274 = pneg %p131
        %p275 = pneg %p128
        %p276 = pneg %p152
        %p277 = pneg %p149
        %p278 = pneg %p173
        %p279 = pneg %p170
        %p280 = pneg %p199
        %p281 = pneg %p196
        %s282 = sand.u32 %s186, 1
        %s283 = scalar_lea.sflag [#allocation3], %s282
        %s284 = sand.u32 %s186, 1
        %s285 = smul.addr %s284, 32
        %s286 = scalar_lea.vmem [#allocation2], %s285
        %p287 = scmp.lt.s32.totalorder %s21, 1
        %s288 = scalar_select %p287, %s21, 1
        %s289 = smul.addr %s288, 2
        %s290 = smul.addr %s289, 8
        %s291 = scalar_lea.vmem %s0, %s290
        %p292 = scmp.lt.s32.totalorder %s21, 1
        %s293 = scalar_select %p292, %s21, 1
        %s294 = smul.addr %s293, 4
        %s295 = smul.addr %s294, 8
        %s296 = scalar_lea.vmem %s1, %s295
        %v298 = vld [vmem:[%s291] sm:$0xff]
        %v299 = vld [vmem:[%s291 + $0x8] sm:$0xff]
        %v300 = vpack.c.bf16 %v299, %v298
        %v301 = vld [vmem:[%s4] sm:$0xf]
        %v302 = vld [vmem:[%s4 + $0x4] sm:$0xf]
        %v303 = vld [vmem:[%s5] sm:$0xff]
        %v304 = vld [vmem:[%s5 + $0x8] sm:$0xff]
        %306 = vset.pattern.permute.xlu0 0
        %307 = vperm.xlu0 %306, %v303
        %v308 = vpop.permute.xlu0 %307
        %311 = vset.pattern.permute.xlu0 0
        %312 = vperm.xlu0 %311, %v304
        %v313 = vpop.permute.xlu0 %312
        %v317 = vunpack.c.l.b16 %v301
        %v318 = vunpack.c.l.b16 %v302
        %v319 = vpack.c.b16 %v318, %v317
        %vm320 = vcmask 130048
        %v322 = vsel %vm320, %v319, 0
        %324 = vmatprep.subr.bf16.mxu0 0
        %325 = vmatpush1.bf16.msra.mxu0 %v300
        %326 = vmatprep.subr.bf16.mxu0 0
        %327 = vmatpush1.bf16.msra.mxu0 0
        %328 = vmatprep.subr.bf16.mxu0 0
        %329 = vmatpush1.bf16.msra.mxu0 0
        %330 = vmatprep.subr.bf16.mxu0 0
        %331 = vmatpush1.bf16.msra.mxu0 0
        %332 = vmatprep.subr.bf16.mxu0 0
        %333 = vmatpush1.bf16.msra.mxu0 0
        %334 = vmatprep.subr.bf16.mxu0 0
        %335 = vmatpush1.bf16.msra.mxu0 0
        %336 = vmatprep.subr.bf16.mxu0 0
        %337 = vmatpush1.bf16.msra.mxu0 0
        %338 = vmatprep.subr.bf16.mxu0 0
        %339 = vmatpush1.bf16.msra.mxu0 0
        %340 = vmatprep.subr.bf16.mxu0 0
        %341 = vmatpush1.bf16.msra.mxu0 0
        %342 = vmatprep.subr.bf16.mxu0 0
        %343 = vmatpush1.bf16.msra.mxu0 0
        %344 = vmatprep.subr.bf16.mxu0 0
        %345 = vmatpush1.bf16.msra.mxu0 0
        %346 = vmatprep.subr.bf16.mxu0 0
        %347 = vmatpush1.bf16.msra.mxu0 0
        %348 = vmatprep.subr.bf16.mxu0 0
        %349 = vmatpush1.bf16.msra.mxu0 0
        %350 = vmatprep.subr.bf16.mxu0 0
        %351 = vmatpush1.bf16.msra.mxu0 0
        %352 = vmatprep.subr.bf16.mxu0 0
        %353 = vmatpush1.bf16.msra.mxu0 0
        %354 = vmatprep.subr.bf16.mxu0 0
        %355 = vmatpush1.bf16.msra.mxu0 0
        %356 = vmatprep.mubr.bf16.mxu0 0
        %357 = vmatmul.mubr.bf16.gmra.mrb[0].mxu0 %v322
        %v358 = vpop.f32.mrb[0].mxu0
        %v359 = vadd.f32 %v308, %v358
        %v360 = vpop.f32.mrb[0].mxu0
        %v361 = vpop.f32.mrb[0].mxu0
        %v362 = vadd.f32 %v313, %v361
        %v363 = vpop.f32.mrb[0].mxu0
        %364 = vdwg.mxu0
        %365 = vxpose.xlu0.b32.start [1/16] %v298, 128
        %366 = vxpose.xlu0.b32.cont [2/16] %v299, 128
        %367 = vxpose.xlu0.b32.cont [3/16] 0.0, 128
        %368 = vxpose.xlu0.b32.cont [4/16] 0.0, 128
        %369 = vxpose.xlu0.b32.cont [5/16] 0.0, 128
        %370 = vxpose.xlu0.b32.cont [6/16] 0.0, 128
        %371 = vxpose.xlu0.b32.cont [7/16] 0.0, 128
        %372 = vxpose.xlu0.b32.cont [8/16] 0.0, 128
        %373 = vxpose.xlu0.b32.cont [9/16] 0.0, 128
        %374 = vxpose.xlu0.b32.cont [10/16] 0.0, 128
        %375 = vxpose.xlu0.b32.cont [11/16] 0.0, 128
        %376 = vxpose.xlu0.b32.cont [12/16] 0.0, 128
        %377 = vxpose.xlu0.b32.cont [13/16] 0.0, 128
        %378 = vxpose.xlu0.b32.cont [14/16] 0.0, 128
        %379 = vxpose.xlu0.b32.cont [15/16] 0.0, 128
        %380 = vxpose.xlu0.b32.end [16/16] 0.0, 128
        %v381 = vpop.trf.xlu0
        %v382 = vpop.trf.xlu0
        %v383 = vpop.trf.xlu0
        %v384 = vpop.trf.xlu0
        %v385 = vpop.trf.xlu0
        %v386 = vpop.trf.xlu0
        %v387 = vpop.trf.xlu0
        %v388 = vpop.trf.xlu0
        %v389 = vpop.trf.xlu0
        %v390 = vpop.trf.xlu0
        %v391 = vpop.trf.xlu0
        %v392 = vpop.trf.xlu0
        %v393 = vpop.trf.xlu0
        %v394 = vpop.trf.xlu0
        %v395 = vpop.trf.xlu0
        %v396 = vpop.trf.xlu0
        %v397 = vpack.c.bf16 %v382, %v381
        %v398 = vpack.c.bf16 %v384, %v383
        %v399 = vpack.c.bf16 %v386, %v385
        %v400 = vpack.c.bf16 %v388, %v387
        %v401 = vld [vmem:[%s2] sm:$0xf]
        %v402 = vld [vmem:[%s2 + $0x4] sm:$0xf]
        %v405 = vunpack.c.l.b16 %v401
        %v406 = vunpack.c.l.b16 %v402
        %v407 = vpack.c.b16 %v406, %v405
        %v410 = vsel %vm320, %v397, 0
        %v413 = vsel %vm320, %v398, 0
        %v416 = vsel %vm320, %v399, 0
        %v419 = vsel %vm320, %v400, 0
        %421 = vmatprep.subr.bf16.mxu0 0
        %422 = vmatpush1.bf16.msra.mxu0 %v407
        %423 = vmatprep.subr.bf16.mxu0 0
        %424 = vmatpush1.bf16.msra.mxu0 0
        %425 = vmatprep.subr.bf16.mxu0 0
        %426 = vmatpush1.bf16.msra.mxu0 0
        %427 = vmatprep.subr.bf16.mxu0 0
        %428 = vmatpush1.bf16.msra.mxu0 0
        %429 = vmatprep.subr.bf16.mxu0 0
        %430 = vmatpush1.bf16.msra.mxu0 0
        %431 = vmatprep.subr.bf16.mxu0 0
        %432 = vmatpush1.bf16.msra.mxu0 0
        %433 = vmatprep.subr.bf16.mxu0 0
        %434 = vmatpush1.bf16.msra.mxu0 0
        %435 = vmatprep.subr.bf16.mxu0 0
        %436 = vmatpush1.bf16.msra.mxu0 0
        %437 = vmatprep.subr.bf16.mxu0 0
        %438 = vmatpush1.bf16.msra.mxu0 0
        %439 = vmatprep.subr.bf16.mxu0 0
        %440 = vmatpush1.bf16.msra.mxu0 0
        %441 = vmatprep.subr.bf16.mxu0 0
        %442 = vmatpush1.bf16.msra.mxu0 0
        %443 = vmatprep.subr.bf16.mxu0 0
        %444 = vmatpush1.bf16.msra.mxu0 0
        %445 = vmatprep.subr.bf16.mxu0 0
        %446 = vmatpush1.bf16.msra.mxu0 0
        %447 = vmatprep.subr.bf16.mxu0 0
        %448 = vmatpush1.bf16.msra.mxu0 0
        %449 = vmatprep.subr.bf16.mxu0 0
        %450 = vmatpush1.bf16.msra.mxu0 0
        %451 = vmatprep.subr.bf16.mxu0 0
        %452 = vmatpush1.bf16.msra.mxu0 0
        %453 = vmatprep.mubr.bf16.mxu0 0
        %454 = vmatmul.mubr.bf16.gmra.mrb[0].mxu0 %v410
        %v455 = vpop.f32.mrb[0].mxu0
        %v456 = vadd.f32 0.0, %v455
        %v457 = vpop.f32.mrb[0].mxu0
        %v458 = vpop.f32.mrb[0].mxu0
        %v459 = vadd.f32 0.0, %v458
        %v460 = vpop.f32.mrb[0].mxu0
        %461 = vmatprep.mubr.bf16.mxu0 0
        %462 = vmatmul.mubr.bf16.gmra.mrb[0].mxu0 %v413
        %v463 = vpop.f32.mrb[0].mxu0
        %v464 = vadd.f32 0.0, %v463
        %v465 = vpop.f32.mrb[0].mxu0
        %v466 = vpop.f32.mrb[0].mxu0
        %v467 = vadd.f32 0.0, %v466
        %v468 = vpop.f32.mrb[0].mxu0
        %469 = vmatprep.mubr.bf16.mxu0 0
        %470 = vmatmul.mubr.bf16.gmra.mrb[0].mxu0 %v416
        %v471 = vpop.f32.mrb[0].mxu0
        %v472 = vadd.f32 0.0, %v471
        %v473 = vpop.f32.mrb[0].mxu0
        %v474 = vpop.f32.mrb[0].mxu0
        %v475 = vadd.f32 0.0, %v474
        %v476 = vpop.f32.mrb[0].mxu0
        %477 = vmatprep.mubr.bf16.mxu0 0
        %478 = vmatmul.mubr.bf16.gmra.mrb[0].mxu0 %v419
        %v479 = vpop.f32.mrb[0].mxu0
        %v480 = vadd.f32 0.0, %v479
        %v481 = vpop.f32.mrb[0].mxu0
        %v482 = vpop.f32.mrb[0].mxu0
        %v483 = vadd.f32 0.0, %v482
        %v484 = vpop.f32.mrb[0].mxu0
        %485 = vdwg.mxu0
        %v486 = vpack.c.bf16 %v459, %v456
        %v487 = vpack.c.bf16 %v467, %v464
        %v488 = vpack.c.bf16 %v475, %v472
        %v489 = vpack.c.bf16 %v483, %v480
        %v490 = vld [vmem:[%s3] sm:$0xff]
        %v491 = vld [vmem:[%s3 + $0x8] sm:$0xff]
        %493 = vset.pattern.permute.xlu0 0
        %494 = vperm.xlu0 %493, %v490
        %v495 = vpop.permute.xlu0 %494
        %498 = vset.pattern.permute.xlu0 0
        %499 = vperm.xlu0 %498, %v491
        %v500 = vpop.permute.xlu0 %499
        %v502 = vmul.f32 %v298, %v495
        %v503 = vmul.f32 %v299, %v500
        %vm504 = vcmask 523264
        %v505 = vsel %vm504, %v502, 0.0
        %v506 = vsel %vm504, %v503, 0.0
        %v507 = vadd.f32 %v505, %v506
        %v508 = vrot.slane %v507, 4
        %v509 = vadd.f32 %v507, %v508
        %v510 = vrot.slane %v509, 2
        %v511 = vadd.f32 %v509, %v510
        %v512 = vrot.slane %v511, 1
        %v513 = vadd.f32 %v511, %v512
        %v515 = vsel %vm320, %v486, 0
        %v518 = vsel %vm320, %v487, 0
        %v521 = vsel %vm320, %v488, 0
        %v524 = vsel %vm320, %v489, 0
        %526 = vmatprep.subr.bf16.mxu0 0
        %527 = vmatpush1.bf16.msra.mxu0 %v300
        %528 = vmatprep.subr.bf16.mxu0 0
        %529 = vmatpush1.bf16.msra.mxu0 0
        %530 = vmatprep.subr.bf16.mxu0 0
        %531 = vmatpush1.bf16.msra.mxu0 0
        %532 = vmatprep.subr.bf16.mxu0 0
        %533 = vmatpush1.bf16.msra.mxu0 0
        %534 = vmatprep.subr.bf16.mxu0 0
        %535 = vmatpush1.bf16.msra.mxu0 0
        %536 = vmatprep.subr.bf16.mxu0 0
        %537 = vmatpush1.bf16.msra.mxu0 0
        %538 = vmatprep.subr.bf16.mxu0 0
        %539 = vmatpush1.bf16.msra.mxu0 0
        %540 = vmatprep.subr.bf16.mxu0 0
        %541 = vmatpush1.bf16.msra.mxu0 0
        %542 = vmatprep.subr.bf16.mxu0 0
        %543 = vmatpush1.bf16.msra.mxu0 0
        %544 = vmatprep.subr.bf16.mxu0 0
        %545 = vmatpush1.bf16.msra.mxu0 0
        %546 = vmatprep.subr.bf16.mxu0 0
        %547 = vmatpush1.bf16.msra.mxu0 0
        %548 = vmatprep.subr.bf16.mxu0 0
        %549 = vmatpush1.bf16.msra.mxu0 0
        %550 = vmatprep.subr.bf16.mxu0 0
        %551 = vmatpush1.bf16.msra.mxu0 0
        %552 = vmatprep.subr.bf16.mxu0 0
        %553 = vmatpush1.bf16.msra.mxu0 0
        %554 = vmatprep.subr.bf16.mxu0 0
        %555 = vmatpush1.bf16.msra.mxu0 0
        %556 = vmatprep.subr.bf16.mxu0 0
        %557 = vmatpush1.bf16.msra.mxu0 0
        %558 = vmatprep.mubr.bf16.mxu0 0
        %559 = vmatmul.mubr.bf16.gmra.mrb[0].mxu0 %v515
        %v560 = vpop.f32.mrb[0].mxu0
        %v561 = vadd.f32 %v513, %v560
        %v562 = vpop.f32.mrb[0].mxu0
        %v563 = vpop.f32.mrb[0].mxu0
        %v564 = vadd.f32 %v513, %v563
        %v565 = vpop.f32.mrb[0].mxu0
        %566 = vmatprep.mubr.bf16.mxu0 0
        %567 = vmatmul.mubr.bf16.gmra.mrb[0].mxu0 %v518
        %v568 = vpop.f32.mrb[0].mxu0
        %v569 = vadd.f32 %v513, %v568
        %v570 = vpop.f32.mrb[0].mxu0
        %v571 = vpop.f32.mrb[0].mxu0
        %v572 = vadd.f32 %v513, %v571
        %v573 = vpop.f32.mrb[0].mxu0
        %574 = vmatprep.mubr.bf16.mxu0 0
        %575 = vmatmul.mubr.bf16.gmra.mrb[0].mxu0 %v521
        %v576 = vpop.f32.mrb[0].mxu0
        %v577 = vadd.f32 %v513, %v576
        %v578 = vpop.f32.mrb[0].mxu0
        %v579 = vpop.f32.mrb[0].mxu0
        %v580 = vadd.f32 %v513, %v579
        %v581 = vpop.f32.mrb[0].mxu0
        %582 = vmatprep.mubr.bf16.mxu0 0
        %583 = vmatmul.mubr.bf16.gmra.mrb[0].mxu0 %v524
        %v584 = vpop.f32.mrb[0].mxu0
        %v585 = vadd.f32 %v513, %v584
        %v586 = vpop.f32.mrb[0].mxu0
        %v587 = vpop.f32.mrb[0].mxu0
        %v588 = vadd.f32 %v513, %v587
        %v589 = vpop.f32.mrb[0].mxu0
        %590 = vdwg.mxu0
        %v591 = vsel %vm504, %v561, -inf
        %592 = vmax.xlane.f32.xlu0 %v591
        %v593 = vpop.xlane.xlu0 %592
        %v594 = vsel %vm504, %v564, -inf
        %595 = vmax.xlane.f32.xlu0 %v594
        %v596 = vpop.xlane.xlu0 %595
        %v597 = vsel %vm504, %v569, -inf
        %598 = vmax.xlane.f32.xlu0 %v597
        %v599 = vpop.xlane.xlu0 %598
        %v600 = vsel %vm504, %v572, -inf
        %601 = vmax.xlane.f32.xlu0 %v600
        %v602 = vpop.xlane.xlu0 %601
        %v603 = vsel %vm504, %v577, -inf
        %604 = vmax.xlane.f32.xlu0 %v603
        %v605 = vpop.xlane.xlu0 %604
        %v606 = vsel %vm504, %v580, -inf
        %607 = vmax.xlane.f32.xlu0 %v606
        %v608 = vpop.xlane.xlu0 %607
        %v609 = vsel %vm504, %v585, -inf
        %610 = vmax.xlane.f32.xlu0 %v609
        %v611 = vpop.xlane.xlu0 %610
        %v612 = vsel %vm504, %v588, -inf
        %613 = vmax.xlane.f32.xlu0 %v612
        %v614 = vpop.xlane.xlu0 %613
        %v615 = vsub.f32 %v561, %v593
        %v616 = vsub.f32 %v564, %v596
        %v617 = vsub.f32 %v569, %v599
        %v618 = vsub.f32 %v572, %v602
        %v619 = vsub.f32 %v577, %v605
        %v620 = vsub.f32 %v580, %v608
        %v621 = vsub.f32 %v585, %v611
        %v622 = vsub.f32 %v588, %v614
        %v623 = vmul.f32 %v615, 1.442695
        %v624 = vpow.pop %v623
        %v625 = vmul.f32 %v616, 1.442695
        %v626 = vpow.pop %v625
        %v627 = vmul.f32 %v617, 1.442695
        %v628 = vpow.pop %v627
        %v629 = vmul.f32 %v618, 1.442695
        %v630 = vpow.pop %v629
        %v631 = vmul.f32 %v619, 1.442695
        %v632 = vpow.pop %v631
        %v633 = vmul.f32 %v620, 1.442695
        %v634 = vpow.pop %v633
        %v635 = vmul.f32 %v621, 1.442695
        %v636 = vpow.pop %v635
        %v637 = vmul.f32 %v622, 1.442695
        %v638 = vpow.pop %v637
        %v639 = vsel %vm504, %v624, 0.0
        %640 = vadd.xlane.f32.xlu0 %v639
        %v641 = vpop.xlane.xlu0 %640
        %v642 = vsel %vm504, %v626, 0.0
        %643 = vadd.xlane.f32.xlu0 %v642
        %v644 = vpop.xlane.xlu0 %643
        %v645 = vsel %vm504, %v628, 0.0
        %646 = vadd.xlane.f32.xlu0 %v645
        %v647 = vpop.xlane.xlu0 %646
        %v648 = vsel %vm504, %v630, 0.0
        %649 = vadd.xlane.f32.xlu0 %v648
        %v650 = vpop.xlane.xlu0 %649
        %v651 = vsel %vm504, %v632, 0.0
        %652 = vadd.xlane.f32.xlu0 %v651
        %v653 = vpop.xlane.xlu0 %652
        %v654 = vsel %vm504, %v634, 0.0
        %655 = vadd.xlane.f32.xlu0 %v654
        %v656 = vpop.xlane.xlu0 %655
        %v657 = vsel %vm504, %v636, 0.0
        %658 = vadd.xlane.f32.xlu0 %v657
        %v659 = vpop.xlane.xlu0 %658
        %v660 = vsel %vm504, %v638, 0.0
        %661 = vadd.xlane.f32.xlu0 %v660
        %v662 = vpop.xlane.xlu0 %661
        %v663 = vrcp.pop %v641
        %v664 = vrcp.pop %v644
        %v665 = vrcp.pop %v647
        %v666 = vrcp.pop %v650
        %v667 = vrcp.pop %v653
        %v668 = vrcp.pop %v656
        %v669 = vrcp.pop %v659
        %v670 = vrcp.pop %v662
        %v671 = vmul.f32 %v624, %v663
        %v672 = vmul.f32 %v626, %v664
        %v673 = vmul.f32 %v628, %v665
        %v674 = vmul.f32 %v630, %v666
        %v675 = vmul.f32 %v632, %v667
        %v676 = vmul.f32 %v634, %v668
        %v677 = vmul.f32 %v636, %v669
        %v678 = vmul.f32 %v638, %v670
        %v679 = vpack.c.bf16 %v362, %v359
        %v680 = vpack.c.bf16 %v672, %v671
        %v681 = vpack.c.bf16 %v674, %v673
        %v682 = vpack.c.bf16 %v676, %v675
        %v683 = vpack.c.bf16 %v678, %v677
        %v685 = vsel %vm504, %v679, 0
        %v688 = vsel %vm504, %v680, 0
        %v691 = vsel %vm504, %v681, 0
        %v694 = vsel %vm504, %v682, 0
        %v697 = vsel %vm504, %v683, 0
        %699 = vmatprep.subr.bf16.mxu0 0
        %700 = vmatpush1.bf16.xpose.msra.mxu0 %v688
        %701 = vmatprep.subr.bf16.mxu0 0
        %702 = vmatpush1.bf16.xpose.msra.mxu0 %v691
        %703 = vmatprep.subr.bf16.mxu0 0
        %704 = vmatpush1.bf16.xpose.msra.mxu0 %v694
        %705 = vmatprep.subr.bf16.mxu0 0
        %706 = vmatpush1.bf16.xpose.msra.mxu0 %v697
        %707 = vmatprep.subr.bf16.mxu0 0
        %708 = vmatpush1.bf16.xpose.msra.mxu0 0
        %709 = vmatprep.subr.bf16.mxu0 0
        %710 = vmatpush1.bf16.xpose.msra.mxu0 0
        %711 = vmatprep.subr.bf16.mxu0 0
        %712 = vmatpush1.bf16.xpose.msra.mxu0 0
        %713 = vmatprep.subr.bf16.mxu0 0
        %714 = vmatpush1.bf16.xpose.msra.mxu0 0
        %715 = vmatprep.subr.bf16.mxu0 0
        %716 = vmatpush1.bf16.xpose.msra.mxu0 0
        %717 = vmatprep.subr.bf16.mxu0 0
        %718 = vmatpush1.bf16.xpose.msra.mxu0 0
        %719 = vmatprep.subr.bf16.mxu0 0
        %720 = vmatpush1.bf16.xpose.msra.mxu0 0
        %721 = vmatprep.subr.bf16.mxu0 0
        %722 = vmatpush1.bf16.xpose.msra.mxu0 0
        %723 = vmatprep.subr.bf16.mxu0 0
        %724 = vmatpush1.bf16.xpose.msra.mxu0 0
        %725 = vmatprep.subr.bf16.mxu0 0
        %726 = vmatpush1.bf16.xpose.msra.mxu0 0
        %727 = vmatprep.subr.bf16.mxu0 0
        %728 = vmatpush1.bf16.xpose.msra.mxu0 0
        %729 = vmatprep.subr.bf16.mxu0 0
        %730 = vmatpush1.bf16.xpose.msra.mxu0 0
        %731 = vmatprep.mubr.bf16.mxu0 0
        %732 = vmatmul.mubr.bf16.gmra.mrb[0].mxu0 %v685
        %v733 = vpop.f32.mrb[0].mxu0
        %v734 = vadd.f32 0.0, %v733
        %v735 = vpop.f32.mrb[0].mxu0
        %v736 = vpop.f32.mrb[0].mxu0
        %v737 = vadd.f32 0.0, %v736
        %v738 = vpop.f32.mrb[0].mxu0
        %739 = vdwg.mxu0
        %v740 = vpack.c.bf16 %v737, %v734
        %v741 = vld [vmem:[%s6] sm:$0xf]
        %v742 = vld [vmem:[%s6 + $0x4] sm:$0xf]
        %v743 = vld [vmem:[%s6 + $0x8] sm:$0xf]
        %v744 = vld [vmem:[%s6 + $0xc] sm:$0xf]
        %v745 = vld [vmem:[%s6 + $0x10] sm:$0xf]
        %v746 = vld [vmem:[%s6 + $0x14] sm:$0xf]
        %v747 = vld [vmem:[%s6 + $0x18] sm:$0xf]
        %v748 = vld [vmem:[%s6 + $0x1c] sm:$0xf]
        %v749 = vld [vmem:[%s6 + $0x20] sm:$0xf]
        %v750 = vld [vmem:[%s6 + $0x24] sm:$0xf]
        %v751 = vld [vmem:[%s6 + $0x28] sm:$0xf]
        %v752 = vld [vmem:[%s6 + $0x2c] sm:$0xf]
        %v753 = vld [vmem:[%s6 + $0x30] sm:$0xf]
        %v754 = vld [vmem:[%s6 + $0x34] sm:$0xf]
        %v755 = vld [vmem:[%s6 + $0x38] sm:$0xf]
        %v756 = vld [vmem:[%s6 + $0x3c] sm:$0xf]
        %v757 = vld [vmem:[%s6 + $0x40] sm:$0xf]
        %v758 = vld [vmem:[%s6 + $0x44] sm:$0xf]
        %v759 = vld [vmem:[%s6 + $0x48] sm:$0xf]
        %v760 = vld [vmem:[%s6 + $0x4c] sm:$0xf]
        %v761 = vld [vmem:[%s6 + $0x50] sm:$0xf]
        %v762 = vld [vmem:[%s6 + $0x54] sm:$0xf]
        %v763 = vld [vmem:[%s6 + $0x58] sm:$0xf]
        %v764 = vld [vmem:[%s6 + $0x5c] sm:$0xf]
        %v765 = vld [vmem:[%s6 + $0x60] sm:$0xf]
        %v766 = vld [vmem:[%s6 + $0x64] sm:$0xf]
        %v767 = vld [vmem:[%s6 + $0x68] sm:$0xf]
        %v768 = vld [vmem:[%s6 + $0x6c] sm:$0xf]
        %v769 = vld [vmem:[%s6 + $0x70] sm:$0xf]
        %v770 = vld [vmem:[%s6 + $0x74] sm:$0xf]
        %v771 = vld [vmem:[%s6 + $0x78] sm:$0xf]
        %v772 = vld [vmem:[%s6 + $0x7c] sm:$0xf]
        %v773 = vld [vmem:[%s296] sm:$0xff]
        %v774 = vld [vmem:[%s296 + $0x8] sm:$0xff]
        %v775 = vld [vmem:[%s296 + $0x10] sm:$0xff]
        %v776 = vld [vmem:[%s296 + $0x18] sm:$0xff]
        %v809 = vunpack.c.l.b16 %v741
        %v810 = vunpack.c.l.b16 %v742
        %v811 = vunpack.c.l.b16 %v743
        %v812 = vunpack.c.l.b16 %v744
        %v813 = vunpack.c.l.b16 %v745
        %v814 = vunpack.c.l.b16 %v746
        %v815 = vunpack.c.l.b16 %v747
        %v816 = vunpack.c.l.b16 %v748
        %v817 = vunpack.c.l.b16 %v749
        %v818 = vunpack.c.l.b16 %v750
        %v819 = vunpack.c.l.b16 %v751
        %v820 = vunpack.c.l.b16 %v752
        %v821 = vunpack.c.l.b16 %v753
        %v822 = vunpack.c.l.b16 %v754
        %v823 = vunpack.c.l.b16 %v755
        %v824 = vunpack.c.l.b16 %v756
        %v825 = vunpack.c.l.b16 %v757
        %v826 = vunpack.c.l.b16 %v758
        %v827 = vunpack.c.l.b16 %v759
        %v828 = vunpack.c.l.b16 %v760
        %v829 = vunpack.c.l.b16 %v761
        %v830 = vunpack.c.l.b16 %v762
        %v831 = vunpack.c.l.b16 %v763
        %v832 = vunpack.c.l.b16 %v764
        %v833 = vunpack.c.l.b16 %v765
        %v834 = vunpack.c.l.b16 %v766
        %v835 = vunpack.c.l.b16 %v767
        %v836 = vunpack.c.l.b16 %v768
        %v837 = vunpack.c.l.b16 %v769
        %v838 = vunpack.c.l.b16 %v770
        %v839 = vunpack.c.l.b16 %v771
        %v840 = vunpack.c.l.b16 %v772
        %v841 = vpack.c.b16 %v810, %v809
        %v842 = vpack.c.b16 %v812, %v811
        %v843 = vpack.c.b16 %v814, %v813
        %v844 = vpack.c.b16 %v816, %v815
        %v845 = vpack.c.b16 %v818, %v817
        %v846 = vpack.c.b16 %v820, %v819
        %v847 = vpack.c.b16 %v822, %v821
        %v848 = vpack.c.b16 %v824, %v823
        %v849 = vpack.c.b16 %v826, %v825
        %v850 = vpack.c.b16 %v828, %v827
        %v851 = vpack.c.b16 %v830, %v829
        %v852 = vpack.c.b16 %v832, %v831
        %v853 = vpack.c.b16 %v834, %v833
        %v854 = vpack.c.b16 %v836, %v835
        %v855 = vpack.c.b16 %v838, %v837
        %v856 = vpack.c.b16 %v840, %v839
        %v858 = vsel %vm504, %v740, 0
        %v861 = vsel %vm504, %v841, 0
        %v864 = vsel %vm504, %v842, 0
        %v867 = vsel %vm504, %v843, 0
        %v870 = vsel %vm504, %v844, 0
        %v873 = vsel %vm504, %v845, 0
        %v876 = vsel %vm504, %v846, 0
        %v879 = vsel %vm504, %v847, 0
        %v882 = vsel %vm504, %v848, 0
        %v885 = vsel %vm504, %v849, 0
        %v888 = vsel %vm504, %v850, 0
        %v891 = vsel %vm504, %v851, 0
        %v894 = vsel %vm504, %v852, 0
        %v897 = vsel %vm504, %v853, 0
        %v900 = vsel %vm504, %v854, 0
        %v903 = vsel %vm504, %v855, 0
        %v906 = vsel %vm504, %v856, 0
        %908 = vmatprep.subr.bf16.mxu0 0
        %909 = vmatpush1.bf16.xpose.msra.mxu0 %v861
        %910 = vmatprep.subr.bf16.mxu0 0
        %911 = vmatpush1.bf16.xpose.msra.mxu0 %v864
        %912 = vmatprep.subr.bf16.mxu0 0
        %913 = vmatpush1.bf16.xpose.msra.mxu0 %v867
        %914 = vmatprep.subr.bf16.mxu0 0
        %915 = vmatpush1.bf16.xpose.msra.mxu0 %v870
        %916 = vmatprep.subr.bf16.mxu0 0
        %917 = vmatpush1.bf16.xpose.msra.mxu0 %v873
        %918 = vmatprep.subr.bf16.mxu0 0
        %919 = vmatpush1.bf16.xpose.msra.mxu0 %v876
        %920 = vmatprep.subr.bf16.mxu0 0
        %921 = vmatpush1.bf16.xpose.msra.mxu0 %v879
        %922 = vmatprep.subr.bf16.mxu0 0
        %923 = vmatpush1.bf16.xpose.msra.mxu0 %v882
        %924 = vmatprep.subr.bf16.mxu0 0
        %925 = vmatpush1.bf16.xpose.msra.mxu0 %v885
        %926 = vmatprep.subr.bf16.mxu0 0
        %927 = vmatpush1.bf16.xpose.msra.mxu0 %v888
        %928 = vmatprep.subr.bf16.mxu0 0
        %929 = vmatpush1.bf16.xpose.msra.mxu0 %v891
        %930 = vmatprep.subr.bf16.mxu0 0
        %931 = vmatpush1.bf16.xpose.msra.mxu0 %v894
        %932 = vmatprep.subr.bf16.mxu0 0
        %933 = vmatpush1.bf16.xpose.msra.mxu0 %v897
        %934 = vmatprep.subr.bf16.mxu0 0
        %935 = vmatpush1.bf16.xpose.msra.mxu0 %v900
        %936 = vmatprep.subr.bf16.mxu0 0
        %937 = vmatpush1.bf16.xpose.msra.mxu0 %v903
        %938 = vmatprep.subr.bf16.mxu0 0
        %939 = vmatpush1.bf16.xpose.msra.mxu0 %v906
        %940 = vmatprep.mubr.bf16.mxu0 0
        %941 = vmatmul.mubr.bf16.gmra.mrb[0].mxu0 %v858
        %v942 = vpop.f32.mrb[0].mxu0
        %v943 = vadd.f32 %v773, %v942
        %v944 = vpop.f32.mrb[0].mxu0
        %v945 = vadd.f32 %v774, %v944
        %v946 = vpop.f32.mrb[0].mxu0
        %v947 = vadd.f32 %v775, %v946
        %v948 = vpop.f32.mrb[0].mxu0
        %v949 = vadd.f32 %v776, %v948
        %950 = vdwg.mxu0
        %v951 = vmax.f32 %v943, 0.0
        %v952 = vmax.f32 %v945, 0.0
        %v953 = vmax.f32 %v947, 0.0
        %v954 = vmax.f32 %v949, 0.0
        %955 = vst [vmem:[%s286] sm:$0xff] %v951
        %956 = vst [vmem:[%s286 + $0x8] sm:$0xff] %v952
        %957 = vst [vmem:[%s286 + $0x10] sm:$0xff] %v953
        %958 = vst [vmem:[%s286 + $0x18] sm:$0xff] %v954
        %s959 = sand.u32 %s186, 1
        %s960 = scalar_lea.sflag [#allocation3], %s959
        %s961 = sand.u32 %s186, 1
        %s962 = smul.addr %s961, 32
        %s963 = scalar_lea.vmem [#allocation2], %s962
        // Predicated region
        $region49: #{tpu_custom_call.1} parent=47 // pred_check
          %p964 = pneg %p196
        $region50: #{tpu_custom_call.1} parent=47 // pred_check_branch
          %966 = sbr.rel (%p964) target = $region52
        $region51: #{tpu_custom_call.1} parent=47 // pred_region
          %s968 = ssub.s32 512, 512
          %969 = vsyncadd %s960, %s968
          %s970 = smul.addr %s21, 4
          %s971 = smul.addr %s970, 128
          %s972 = scalar_lea.hbm %s7, %s971
          %s973 = sshll.u32 %s963, 4
          %s974 = int_to_ptr.vmem [resolvable:$true] %s973
          %979 = dma.vmem_to_hbm [thread:$0]  %s974, 512, %s972, %s960, 256, 256, 16
        $region52: #{tpu_custom_call.1} parent=47 // pred_fallthru
          _
      $region48: #{tpu_custom_call.1} parent=5 // pred_fallthru
        _
      %p980 = scmp.le.s32.totalorder 2, %s16
      // Predicated region
      $region53: #{tpu_custom_call.1} parent=5 // pred_check
        %p981 = pneg %p980
      $region54: #{tpu_custom_call.1} parent=5 // pred_check_branch
        %983 = sbr.rel (%p981) target = $region56
      $region55: #{tpu_custom_call.1} parent=5 // pred_region
        %s984 = ssub.s32 %s16, 2
        // Predicated region
        $region57: #{tpu_custom_call.1} parent=55 // pred_check
          %p985 = pneg %p202
        $region58: #{tpu_custom_call.1} parent=55 // pred_check_branch
          %987 = sbr.rel (%p985) target = $region60
        $region59: #{tpu_custom_call.1} parent=55 // pred_region
          %s988 = sand.u32 %s187, 1
          %s989 = scalar_lea.sflag [#allocation3], %s988
          %s990 = sand.u32 %s187, 1
          %s991 = smul.addr %s990, 32
          %s992 = scalar_lea.vmem [#allocation2], %s991
          %993 = dma.done %s989, 512
        $region60: #{tpu_custom_call.1} parent=55 // pred_fallthru
          _
      $region56: #{tpu_custom_call.1} parent=5 // pred_fallthru
        _
    $region6: #{tpu_custom_call.1} parent=1 // loop_footer
      %s20 = sadd.s32 1, %s16
    $region7: #{tpu_custom_call.1} parent=1 // loop_footer_branch
      %15 = sbr.rel target = $region3
    $region8: #{tpu_custom_call.1} parent=1 // loop_exit
      _
    %994 = vsyncpa [#allocation3], 1
    %s995 = scalar_lea.sflag [#allocation3], 1
    %996 = vsyncpa %s995, 1

</llo_original>
